<compile_context>
chip_gen: v7x
topology: tpu7x:2x2x1
jax: 0.10.0
libtpu: 0.0.40
codegen_flags: <defaults>
</compile_context>

<pallas_src>
import jax
import jax.numpy as jnp
from jax.experimental import pallas as pl
from jax.experimental.pallas import tpu as pltpu


_LANE = 128
_FULLK_VMEM_BUDGET = 28 << 20      # double-buffered footprint target (v7x-safe)
_VMEM_LIMIT_CAP = 56 << 20         # keep requested scoped VMEM under v7x's 64 MiB


def _round_up(x, m):
    return ((x + m - 1) // m) * m


def _pick_tile(dim, candidates, max_waste_frac=0.125):
    """Largest candidate tile whose padding waste on `dim` is small."""
    for c in candidates:
        if _round_up(dim, c) - dim <= max_waste_frac * dim:
            return c
    return candidates[-1]


def _mlp_fullk_kernel(x_ref, wt_ref, b_ref, o_ref):
    # x_ref : (tm, Hk)  activations (compute dtype, e.g. bf16)
    # wt_ref: (Hk, tn)  weight already transposed to (in, out) -> plain (1,0) dot
    # b_ref : (1, tn)   bias (f32)
    # o_ref : (tm, tn)  output
    acc = jnp.dot(x_ref[...], wt_ref[...], preferred_element_type=jnp.float32)
    o_ref[...] = jnp.tanh(acc + b_ref[...]).astype(o_ref.dtype)


def _mlp_acc_kernel(x_ref, wt_ref, b_ref, o_ref, acc_ref):
    # Fallback for very large hidden sizes: K grid axis + resident f32 accumulator.
    k = pl.program_id(2)

    @pl.when(k == 0)
    def _():
        acc_ref[...] = jnp.zeros_like(acc_ref)

    acc_ref[...] += jnp.dot(x_ref[...], wt_ref[...],
                            preferred_element_type=jnp.float32)

    @pl.when(k == pl.num_programs(2) - 1)
    def _():
        o_ref[...] = jnp.tanh(acc_ref[...] + b_ref[...]).astype(o_ref.dtype)


def prepare_mlp_params(weight, bias, *, compute_dtype=jnp.bfloat16):
    """One-time weight/bias prep (call at init, reuse across forward calls).

    Transposes W to (in, out), casts to the MXU compute dtype (bf16 default),
    and pads to lane/tile multiples -- removing the per-call HBM transpose,
    cast and pad of the full weight.
    """
    h_out, h_in = weight.shape
    assert h_out == h_in, "MLPLayer dense is square (hidden -> hidden)"
    assert bias.shape == (h_out,)
    H = h_in
    if compute_dtype is None:
        compute_dtype = weight.dtype

    Hk = _round_up(H, _LANE)                    # reduction dim (lane aligned)
    tn = _pick_tile(H, (512, 256, 128))         # output-feature tile (MXU aligned)
    Hn = _round_up(H, tn)

    wT = weight.T.astype(compute_dtype)         # (in, out): no per-tile transpose in-kernel
    if (Hk, Hn) != (H, H):
        wT = jnp.pad(wT, ((0, Hk - H), (0, Hn - H)))
    b2d = bias.astype(jnp.float32).reshape(1, H)
    if Hn != H:
        b2d = jnp.pad(b2d, ((0, 0), (0, Hn - H)))

    return dict(wT=wT, b2d=b2d, H=H, Hk=Hk, Hn=Hn, tn=tn,
                compute_dtype=jnp.dtype(compute_dtype))


def mlp_layer(features, weight=None, bias=None, *, params=None,
              compute_dtype=jnp.bfloat16):
    """Pallas equivalent of MLPLayer.forward: tanh(features @ weight.T + bias).

    Pass `params=prepare_mlp_params(weight, bias)` to amortize the one-time
    weight transpose/cast/pad across many calls.
    """
    if params is None:
        assert weight is not None and bias is not None
        params = prepare_mlp_params(weight, bias, compute_dtype=compute_dtype)

    wT, b2d = params["wT"], params["b2d"]
    H, Hk, Hn, tn = params["H"], params["Hk"], params["Hn"], params["tn"]
    cdt = params["compute_dtype"]

    M, h_in = features.shape
    assert h_in == H
    out_dtype = features.dtype
    cdt_size = jnp.dtype(cdt).itemsize
    out_size = jnp.dtype(out_dtype).itemsize

    # ---- batch tile: minimize M padding, keep sublane aligned ---------------
    tm = _pick_tile(M, (512, 256, 128, 64, 32, 16, 8))

    # ---- full-K (2-D grid, no accumulator) vs 3-D accumulator fallback ------
    def fullk_bytes(tm_):
        # double-buffered x tile + w tile + out tile + bias tile
        return 2 * (tm_ * Hk * cdt_size + Hk * tn * cdt_size
                    + tm_ * tn * out_size + tn * 4)

    while fullk_bytes(tm) > _FULLK_VMEM_BUDGET and tm > 128:
        tm = max(128, tm // 2)
    use_fullk = fullk_bytes(tm) <= _FULLK_VMEM_BUDGET

    Mp = _round_up(M, tm)
    x = features.astype(cdt)
    if (Mp, Hk) != (M, H):
        x = jnp.pad(x, ((0, Mp - M), (0, Hk - H)))

    n_i, n_j = Mp // tm, Hn // tn

    # Advisory cost estimate with real re-read counts (W read n_i times,
    # x read n_j times, output written once in out_dtype).
    cost = pl.CostEstimate(
        flops=2 * M * H * H,
        transcendentals=M * H,
        bytes_accessed=(Mp * Hk * cdt_size) * n_j + (Hk * Hn * cdt_size) * n_i
        + Mp * Hn * out_size + Hn * 4 * n_i,
    )

    if use_fullk:
        footprint = fullk_bytes(tm)
        grid_spec = pltpu.PrefetchScalarGridSpec(
            num_scalar_prefetch=0,
            grid=(n_i, n_j),
            in_specs=[
                pl.BlockSpec((tm, Hk), lambda i, j: (i, 0)),   # activations
                pl.BlockSpec((Hk, tn), lambda i, j: (0, j)),   # transposed weight
                pl.BlockSpec((1, tn), lambda i, j: (0, j)),    # bias
            ],
            out_specs=pl.BlockSpec((tm, tn), lambda i, j: (i, j)),
        )
        kernel = _mlp_fullk_kernel
        semantics = ("parallel", "parallel")
    else:
        # Only reached for very large hidden sizes that don't fit the full-K budget.
        tk = 512 if Hk % 512 == 0 else (256 if Hk % 256 == 0 else 128)
        footprint = (2 * (tm * tk + tk * tn) * cdt_size
                     + 2 * (tm * tn * out_size + tn * 4) + tm * tn * 4)
        grid_spec = pltpu.PrefetchScalarGridSpec(
            num_scalar_prefetch=0,
            grid=(n_i, n_j, Hk // tk),
            in_specs=[
                pl.BlockSpec((tm, tk), lambda i, j, k: (i, k)),
                pl.BlockSpec((tk, tn), lambda i, j, k: (k, j)),
                pl.BlockSpec((1, tn), lambda i, j, k: (0, j)),
            ],
            out_specs=pl.BlockSpec((tm, tn), lambda i, j, k: (i, j)),
            scratch_shapes=[pltpu.VMEM((tm, tn), jnp.float32)],
        )
        kernel = _mlp_acc_kernel
        semantics = ("parallel", "parallel", "arbitrary")

    # Explicit scoped-VMEM budget: footprint + headroom, at least 16 MiB,
    # capped below v7x's 64 MiB physical VMEM.
    vmem_limit = int(min(max(footprint + footprint // 4 + (2 << 20), 16 << 20),
                         _VMEM_LIMIT_CAP))

    out = pl.pallas_call(
        kernel,
        out_shape=jax.ShapeDtypeStruct((Mp, Hn), out_dtype),
        grid_spec=grid_spec,
        compiler_params=pltpu.CompilerParams(
            dimension_semantics=semantics,
            vmem_limit_bytes=vmem_limit,
        ),
        cost_estimate=cost,
    )(x, wT, b2d)

    if (Mp, Hn) != (M, H):
        out = out[:M, :H]
    return out


if __name__ == "__main__":
    # --- small shapes matching the module's spirit (config.hidden_size) ---
    batch, hidden = 8, 32

    key = jax.random.PRNGKey(0)
    k_x, k_w, k_b = jax.random.split(key, 3)

    features = jax.random.normal(k_x, (batch, hidden), dtype=jnp.float32)
    # nn.Linear(hidden, hidden): weight (out, in), bias (out,)
    weight = jax.random.normal(k_w, (hidden, hidden), dtype=jnp.float32) * 0.05
    bias = jax.random.normal(k_b, (hidden,), dtype=jnp.float32) * 0.05

    ref = jnp.tanh(features @ weight.T + bias)

    # Default path: bf16 MXU operands, f32 accumulate + epilogue.
    out = jax.block_until_ready(mlp_layer(features, weight, bias))
    assert out.shape == (batch, hidden)
    assert jnp.allclose(out, ref, atol=2e-2, rtol=2e-2)

    # Full-precision path: exact-semantics check with tight tolerance.
    out_f32 = jax.block_until_ready(
        mlp_layer(features, weight, bias, compute_dtype=jnp.float32))
    assert jnp.allclose(out_f32, ref, atol=1e-5, rtol=1e-5)

    # --- second check: multi-tile grid, padding, and prepared-weight reuse ---
    M2, H2 = 384, 640   # tm=128 (no M padding), tn=128, Hk=Hn=640
    k_x2, k_w2, k_b2 = jax.random.split(jax.random.PRNGKey(1), 3)
    x2 = jax.random.normal(k_x2, (M2, H2), dtype=jnp.float32)
    w2 = jax.random.normal(k_w2, (H2, H2), dtype=jnp.float32) * 0.02
    b2 = jax.random.normal(k_b2, (H2,), dtype=jnp.float32) * 0.02

    params2 = prepare_mlp_params(w2, b2)            # one-time weight prep
    out2 = jax.block_until_ready(mlp_layer(x2, params=params2))
    out2b = jax.block_until_ready(mlp_layer(x2, params=params2))  # reuse, no re-prep
    ref2 = jnp.tanh(x2 @ w2.T + b2)
    assert out2.shape == (M2, H2)
    assert jnp.allclose(out2, ref2, atol=3e-2, rtol=3e-2)
    assert jnp.allclose(out2b, out2)

    print("KERNEL_OK")
</pallas_src>

<mosaic_0001>
module attributes {stable_mosaic.version = 11 : i64} {
  func.func @_mlp_fullk_kernel(%arg0: i32, %arg1: i32, %arg2: memref<8x128xbf16, #tpu.memory_space<vmem>>, %arg3: memref<128x128xbf16, #tpu.memory_space<vmem>>, %arg4: memref<1x128xf32, #tpu.memory_space<vmem>>, %arg5: memref<8x128xf32, #tpu.memory_space<vmem>>) attributes {dimension_semantics = [#tpu.dimension_semantics<parallel>, #tpu.dimension_semantics<parallel>], iteration_bounds = array<i64: 1, 1>, scalar_prefetch = 0 : i64, scratch_operands = 0 : i64, tpu.core_type = #tpu.core_type<tc>, window_params = [{transform_indices = @transform_0, window_bounds = array<i64: 8, 128>}, {transform_indices = @transform_1, window_bounds = array<i64: 128, 128>}, {transform_indices = @transform_2, window_bounds = array<i64: 1, 128>}, {transform_indices = @transform_3, window_bounds = array<i64: 8, 128>}]} {
    %c0 = arith.constant 0 : index
    %c0_0 = arith.constant 0 : index
    %0 = vector.load %arg2[%c0, %c0_0] : memref<8x128xbf16, #tpu.memory_space<vmem>>, vector<8x128xbf16>
    %c0_1 = arith.constant 0 : index
    %c0_2 = arith.constant 0 : index
    %1 = vector.load %arg3[%c0_1, %c0_2] : memref<128x128xbf16, #tpu.memory_space<vmem>>, vector<128x128xbf16>
    %cst = arith.constant dense<0.000000e+00> : vector<8x128xf32>
    %2 = tpu.matmul %0, %1, %cst {dimension_numbers = #tpu.dot_dimension_numbers<[1], [0], [0], [1], [0, 0, 1, 1], [], []>} : vector<8x128xbf16>, vector<128x128xbf16>, vector<8x128xf32> -> vector<8x128xf32>
    %c0_3 = arith.constant 0 : index
    %c0_4 = arith.constant 0 : index
    %3 = vector.load %arg4[%c0_3, %c0_4] : memref<1x128xf32, #tpu.memory_space<vmem>>, vector<1x128xf32>
    %4 = vector.broadcast %3 : vector<1x128xf32> to vector<8x128xf32>
    %5 = arith.addf %2, %4 : vector<8x128xf32>
    %6 = math.tanh %5 : vector<8x128xf32>
    %c0_5 = arith.constant 0 : index
    %c0_6 = arith.constant 0 : index
    %7 = vector.load %arg5[%c0_5, %c0_6] : memref<8x128xf32, #tpu.memory_space<vmem>>, vector<8x128xf32>
    tpu.vector_store %arg5[%c0_5, %c0_6], %6 {strides = array<i32>} : memref<8x128xf32, #tpu.memory_space<vmem>>, vector<8x128xf32>,
    return
  }
  func.func @transform_0(%arg0: i32, %arg1: i32) -> (i32, i32) {
    %c0_i32 = arith.constant 0 : i32
    %c0_i32_0 = arith.constant 0 : i32
    return %arg0, %c0_i32 : i32, i32
  }
  func.func @transform_1(%arg0: i32, %arg1: i32) -> (i32, i32) {
    %c0_i32 = arith.constant 0 : i32
    %c0_i32_0 = arith.constant 0 : i32
    return %c0_i32, %arg1 : i32, i32
  }
  func.func @transform_2(%arg0: i32, %arg1: i32) -> (i32, i32) {
    %c0_i32 = arith.constant 0 : i32
    %c0_i32_0 = arith.constant 0 : i32
    return %c0_i32, %arg1 : i32, i32
  }
  func.func @transform_3(%arg0: i32, %arg1: i32) -> (i32, i32) {
    %c0_i32 = arith.constant 0 : i32
    return %arg0, %arg1 : i32, i32
  }
}

</mosaic_0001>

<llo_original>
// kernel: tpu_custom_call.1
$region0: #{tpu_custom_call.1}
  #allocation0 [shape = 'u32[]', space=smem, size = 0x4, offset = 0x4, fixed_abs, tag = 'smem constant byte address 0x4 - core index']
  #allocation1 [shape = 'u32[144,128]{1,0:T(1,128)}', space=vmem, size = 0x12000, scoped, tag = 'internal scratch']
  %s0 = inlined_call_operand.hbm [shape: bf16[8,128], index: 0, kind: input, shape index: {}]
  %s1 = inlined_call_operand.hbm [shape: bf16[128,128], index: 1, kind: input, shape index: {}]
  %s2 = inlined_call_operand.vmem [shape: f32[1,128], index: 2, kind: input, shape index: {}]
  %s3 = inlined_call_operand.hbm [shape: f32[8,128], index: 3, kind: output, shape index: {}]
  %s4 = sld [smem:[#allocation0]]
  $region30: #{tpu_custom_call.1} parent=0
    _
  %s6 = ssub.s32 1, %s4
  %s7 = scalar_select 0, %s6, %s4
  $region1: #{tpu_custom_call.1} parent=0
    #allocation2 [shape = 'u8[2048]{0}', space=vmem, size = 0x800, scoped, tag = 'input window, operand 0, single buffered']
    #allocation3 [shape = 's32[1]{0}', space=sflag, size = 0x4, scoped, tag = 'scoped memory for tpu_custom_call.1']
    #allocation4 [shape = 's32[1]{0}', space=sflag, size = 0x4, scoped, tag = 'scoped memory for tpu_custom_call.1']
    #allocation5 [shape = 'u8[32768]{0}', space=vmem, size = 0x8000, scoped, tag = 'input window, operand 1, single buffered']
    #allocation6 [shape = 's32[1]{0}', space=sflag, size = 0x4, scoped, tag = 'scoped memory for tpu_custom_call.1']
    #allocation7 [shape = 'u8[4096]{0}', space=vmem, size = 0x1000, scoped, tag = 'output window, operand 0, single buffered']
    %8 = vsyncpa [#allocation3], 0
    %9 = vsyncpa [#allocation6], 0
    %10 = vsyncpa [#allocation4], 0
    // Predicated region
    $region2: #{tpu_custom_call.1} parent=1 // pred_check
      _
    $region3: #{tpu_custom_call.1} parent=1 // pred_check_branch
      %12 = sbr.rel (0) target = $region5
    $region4: #{tpu_custom_call.1} parent=1 // pred_region
      %s14 = ssub.s32 64, 64
      %15 = vsyncadd [#allocation3], %s14
      %s17 = sshll.u32 [#allocation2], 4
      %s18 = int_to_ptr.vmem [resolvable:$true] %s17
      %20 = dma.hbm_to_vmem [thread:$0]  %s0, 64, %s18, [#allocation3]
    $region5: #{tpu_custom_call.1} parent=1 // pred_fallthru
      _
    // Predicated region
    $region6: #{tpu_custom_call.1} parent=1 // pred_check
      _
    $region7: #{tpu_custom_call.1} parent=1 // pred_check_branch
      %22 = sbr.rel (0) target = $region9
    $region8: #{tpu_custom_call.1} parent=1 // pred_region
      %s24 = ssub.s32 1024, 1024
      %25 = vsyncadd [#allocation6], %s24
      %s26 = sshll.u32 [#allocation5], 4
      %s27 = int_to_ptr.vmem [resolvable:$true] %s26
      %32 = dma.hbm_to_vmem [thread:$0]  %s1, 1024, %s27, [#allocation6], 64, 64, 4
    $region9: #{tpu_custom_call.1} parent=1 // pred_fallthru
      _
    // Predicated region
    $region10: #{tpu_custom_call.1} parent=1 // pred_check
      _
    $region11: #{tpu_custom_call.1} parent=1 // pred_check_branch
      %34 = sbr.rel (0) target = $region13
    $region12: #{tpu_custom_call.1} parent=1 // pred_region
      _
    $region13: #{tpu_custom_call.1} parent=1 // pred_fallthru
      _
    // Predicated region
    $region14: #{tpu_custom_call.1} parent=1 // pred_check
      _
    $region15: #{tpu_custom_call.1} parent=1 // pred_check_branch
      %36 = sbr.rel (0) target = $region17
    $region16: #{tpu_custom_call.1} parent=1 // pred_region
      %37 = dma.done [#allocation3], 64
    $region17: #{tpu_custom_call.1} parent=1 // pred_fallthru
      _
    // Predicated region
    $region18: #{tpu_custom_call.1} parent=1 // pred_check
      _
    $region19: #{tpu_custom_call.1} parent=1 // pred_check_branch
      %39 = sbr.rel (0) target = $region21
    $region20: #{tpu_custom_call.1} parent=1 // pred_region
      %40 = dma.done [#allocation6], 1024
    $region21: #{tpu_custom_call.1} parent=1 // pred_fallthru
      _
    %v42 = vld [vmem:[#allocation2] sm:$0xf]
    %v43 = vld [vmem:[#allocation5] sm:$0xf]
    %v44 = vld [vmem:[#allocation5 + $0x4] sm:$0xf]
    %v45 = vld [vmem:[#allocation5 + $0x8] sm:$0xf]
    %v46 = vld [vmem:[#allocation5 + $0xc] sm:$0xf]
    %v47 = vld [vmem:[#allocation5 + $0x10] sm:$0xf]
    %v48 = vld [vmem:[#allocation5 + $0x14] sm:$0xf]
    %v49 = vld [vmem:[#allocation5 + $0x18] sm:$0xf]
    %v50 = vld [vmem:[#allocation5 + $0x1c] sm:$0xf]
    %v51 = vld [vmem:[#allocation5 + $0x20] sm:$0xf]
    %v52 = vld [vmem:[#allocation5 + $0x24] sm:$0xf]
    %v53 = vld [vmem:[#allocation5 + $0x28] sm:$0xf]
    %v54 = vld [vmem:[#allocation5 + $0x2c] sm:$0xf]
    %v55 = vld [vmem:[#allocation5 + $0x30] sm:$0xf]
    %v56 = vld [vmem:[#allocation5 + $0x34] sm:$0xf]
    %v57 = vld [vmem:[#allocation5 + $0x38] sm:$0xf]
    %v58 = vld [vmem:[#allocation5 + $0x3c] sm:$0xf]
    %v59 = vld [vmem:[%s2] sm:$0x1]
    %v61 = vlaneseq
    %v62 = vshrl.u32 %v61, 7
    %v63 = vsub.s32 0, %v62
    %v64 = vrot.slane %v59, %v63
    %v82 = vunpack.c.l.b16 %v43
    %v83 = vunpack.c.l.b16 %v44
    %v84 = vunpack.c.l.b16 %v45
    %v85 = vunpack.c.l.b16 %v46
    %v86 = vunpack.c.l.b16 %v47
    %v87 = vunpack.c.l.b16 %v48
    %v88 = vunpack.c.l.b16 %v49
    %v89 = vunpack.c.l.b16 %v50
    %v90 = vunpack.c.l.b16 %v51
    %v91 = vunpack.c.l.b16 %v52
    %v92 = vunpack.c.l.b16 %v53
    %v93 = vunpack.c.l.b16 %v54
    %v94 = vunpack.c.l.b16 %v55
    %v95 = vunpack.c.l.b16 %v56
    %v96 = vunpack.c.l.b16 %v57
    %v97 = vunpack.c.l.b16 %v58
    %v98 = vpack.c.b16 %v83, %v82
    %v99 = vpack.c.b16 %v85, %v84
    %v100 = vpack.c.b16 %v87, %v86
    %v101 = vpack.c.b16 %v89, %v88
    %v102 = vpack.c.b16 %v91, %v90
    %v103 = vpack.c.b16 %v93, %v92
    %v104 = vpack.c.b16 %v95, %v94
    %v105 = vpack.c.b16 %v97, %v96
    %114 = vmatprep.subr.bf16.mxu0 0
    %115 = vmatpush1.bf16.msra.mxu0 %v98
    %116 = vmatprep.subr.bf16.mxu0 0
    %117 = vmatpush1.bf16.msra.mxu0 %v99
    %118 = vmatprep.subr.bf16.mxu0 0
    %119 = vmatpush1.bf16.msra.mxu0 %v100
    %120 = vmatprep.subr.bf16.mxu0 0
    %121 = vmatpush1.bf16.msra.mxu0 %v101
    %122 = vmatprep.subr.bf16.mxu0 0
    %123 = vmatpush1.bf16.msra.mxu0 %v102
    %124 = vmatprep.subr.bf16.mxu0 0
    %125 = vmatpush1.bf16.msra.mxu0 %v103
    %126 = vmatprep.subr.bf16.mxu0 0
    %127 = vmatpush1.bf16.msra.mxu0 %v104
    %128 = vmatprep.subr.bf16.mxu0 0
    %129 = vmatpush1.bf16.msra.mxu0 %v105
    %130 = vmatprep.subr.bf16.mxu0 0
    %131 = vmatpush1.bf16.msra.mxu0 0
    %132 = vmatprep.subr.bf16.mxu0 0
    %133 = vmatpush1.bf16.msra.mxu0 0
    %134 = vmatprep.subr.bf16.mxu0 0
    %135 = vmatpush1.bf16.msra.mxu0 0
    %136 = vmatprep.subr.bf16.mxu0 0
    %137 = vmatpush1.bf16.msra.mxu0 0
    %138 = vmatprep.subr.bf16.mxu0 0
    %139 = vmatpush1.bf16.msra.mxu0 0
    %140 = vmatprep.subr.bf16.mxu0 0
    %141 = vmatpush1.bf16.msra.mxu0 0
    %142 = vmatprep.subr.bf16.mxu0 0
    %143 = vmatpush1.bf16.msra.mxu0 0
    %144 = vmatprep.subr.bf16.mxu0 0
    %145 = vmatpush1.bf16.msra.mxu0 0
    %146 = vmatprep.mubr.bf16.mxu0 0
    %147 = vmatmul.mubr.bf16.gmra.mrb[0].mxu0 %v42
    %v148 = vpop.f32.mrb[0].mxu0
    %v149 = vadd.f32 %v64, %v148
    %v150 = vpop.f32.mrb[0].mxu0
    %v151 = vpop.f32.mrb[0].mxu0
    %v152 = vpop.f32.mrb[0].mxu0
    %153 = vdwg.mxu0
    %v154 = vtanh.pop %v149
    %155 = vst [vmem:[#allocation7] sm:$0xff] %v154
    // Predicated region
    $region22: #{tpu_custom_call.1} parent=1 // pred_check
      _
    $region23: #{tpu_custom_call.1} parent=1 // pred_check_branch
      %157 = sbr.rel (0) target = $region25
    $region24: #{tpu_custom_call.1} parent=1 // pred_region
      %s159 = ssub.s32 128, 128
      %160 = vsyncadd [#allocation4], %s159
      %s162 = sshll.u32 [#allocation7], 4
      %s163 = int_to_ptr.vmem [resolvable:$true] %s162
      %165 = dma.vmem_to_hbm [thread:$0]  %s163, 128, %s3, [#allocation4]
    $region25: #{tpu_custom_call.1} parent=1 // pred_fallthru
      _
    // Predicated region
    $region26: #{tpu_custom_call.1} parent=1 // pred_check
      _
    $region27: #{tpu_custom_call.1} parent=1 // pred_check_branch
      %167 = sbr.rel (0) target = $region29
    $region28: #{tpu_custom_call.1} parent=1 // pred_region
      %168 = dma.done [#allocation4], 128
    $region29: #{tpu_custom_call.1} parent=1 // pred_fallthru
      _
    %169 = vsyncpa [#allocation3], 1
    %170 = vsyncpa [#allocation6], 1
    %171 = vsyncpa [#allocation4], 1

</llo_original>
